<compile_context>
chip_gen: v7x
topology: tpu7x:2x2x1
jax: 0.10.0
libtpu: 0.0.40
codegen_flags: <defaults>
</compile_context>

<pallas_src>
import jax
import jax.numpy as jnp
from jax.experimental import pallas as pl
from jax.experimental.pallas import tpu as pltpu

EPS = 1e-5
LAMBDA = 0.4   # gcn mixing weights from ConvTemporalGraphical.forward
BETA = 0.6


def _make_kernel(N, C, T, V, KT):
    NC = N * C
    TV = T * V
    pad = (KT - 1) // 2

    def kernel(x_ref, Ab_ref, P_ref,
               g1_ref, b1_ref, a1_ref,
               wcol_ref, bcol_ref,
               g2_ref, b2_ref, a2_ref,
               out_ref):
        x = x_ref[...]                                           # (NC, TV)

        # ---- ConvTemporalGraphical: one block-diagonal matmul against
        #      the pre-mixed adjacency (0.4*A + 0.6*A2) ----
        xg = jnp.dot(x, Ab_ref[...], preferred_element_type=jnp.float32)

        P = P_ref[...]                                           # (NC, NC) channel-averaging

        def batchnorm(z, gamma_rows, beta_rows):
            # training-mode BN, one-pass stats: per-channel mean / E[z^2]
            # via a lane reduce + tiny channel-averaging matmul (var = E[z^2]-mean^2)
            s = jnp.concatenate(
                [jnp.sum(z, axis=1, keepdims=True),
                 jnp.sum(z * z, axis=1, keepdims=True)], axis=1)  # (NC, 2)
            cs = jnp.dot(P, s, preferred_element_type=jnp.float32)  # (NC, 2)
            mean = cs[:, 0:1]
            var = cs[:, 1:2] - mean * mean
            return (z - mean) * jax.lax.rsqrt(var + EPS) * gamma_rows + beta_rows

        # ---- tcn: BN -> PReLU ----
        xh = batchnorm(xg, g1_ref[...], b1_ref[...])
        a1 = a1_ref[0]
        xh = jnp.where(xh >= 0, xh, a1 * xh)

        # ---- temporal Conv2d((kt,1), stride 1, zero pad (kt-1)//2) as a single
        #      im2col matmul: stack time-shifted copies of xh along rows ----
        def time_shift(z, s):
            # result[(n,c), t*V+v] = z[(n,c), (t+s)*V+v], zero outside [0, T)
            if s == 0:
                return z
            k = abs(s) * V
            zeros = jnp.zeros((NC, k), jnp.float32)
            if s > 0:
                return jnp.concatenate([z[:, k:], zeros], axis=1)
            return jnp.concatenate([zeros, z[:, :TV - k]], axis=1)

        xcol = jnp.concatenate([time_shift(xh, dt - pad) for dt in range(KT)],
                               axis=0)                            # (KT*NC, TV)
        conv = jnp.dot(wcol_ref[...], xcol,
                       preferred_element_type=jnp.float32) + bcol_ref[...]

        # ---- BN -> Dropout(p=0, identity) -> identity residual -> final PReLU ----
        y = batchnorm(conv, g2_ref[...], b2_ref[...]) + x
        a2 = a2_ref[0]
        out_ref[...] = jnp.where(y >= 0, y, a2 * y)

    return kernel


def st_gcn_forward(x_nctv, A, A2, params):
    """x_nctv: (N, C, T, V) like PyTorch NCHW. Returns ((N, C, T, V), A)."""
    N, C, T, V = x_nctv.shape
    g1, b1, a1, w_conv, b_conv, g2, b2, a2 = params
    KT = w_conv.shape[2]
    NC, TV = N * C, T * V
    f32 = jnp.float32

    # ---- plain-JAX glue: layout plumbing + parameter packing ----
    x_slab = x_nctv.reshape(NC, TV).astype(f32)          # rows (n,c), lanes (t,v)

    # fold A and A2 into one mixed adjacency, laid out block-diagonally (TV, TV)
    A_mix = (LAMBDA * A + BETA * A2).astype(f32)                         # (T, V, V)
    A_blk = (jnp.eye(T, dtype=f32)[:, None, :, None]
             * A_mix[:, :, None, :]).reshape(TV, TV)

    # per-row (n, c) parameter broadcasts
    def rows(p):
        return jnp.tile(p.astype(f32), N).reshape(NC, 1)

    # channel-averaging matrix: P[i, j] = 1/(N*T*V) iff rows i, j share a channel
    ii = jnp.arange(NC)
    P = ((ii[:, None] % C) == (ii[None, :] % C)).astype(f32) / float(N * T * V)

    # temporal conv as one (NC, KT*NC) matrix; kron with I_N keeps batches separate
    eyeN = jnp.eye(N, dtype=f32)
    W_col = jnp.concatenate(
        [jnp.kron(eyeN, w_conv[:, :, dt, 0].astype(f32)) for dt in range(KT)],
        axis=1)

    kernel = _make_kernel(N, C, T, V, KT)
    vmem = pl.BlockSpec(memory_space=pltpu.MemorySpace.VMEM)
    smem = pl.BlockSpec(memory_space=pltpu.MemorySpace.SMEM)

    out_slab = pl.pallas_call(
        kernel,
        out_shape=jax.ShapeDtypeStruct((NC, TV), f32),
        in_specs=[vmem, vmem, vmem,          # x slab, block-diag A_mix, channel-avg P
                  vmem, vmem, smem,          # BN1 gamma/beta rows, PReLU1 slope
                  vmem, vmem,                # conv weight (im2col), conv bias rows
                  vmem, vmem, smem],         # BN2 gamma/beta rows, final PReLU slope
        out_specs=vmem,
    )(x_slab, A_blk, P,
      rows(g1), rows(b1), a1.astype(f32).reshape(1),
      W_col, rows(b_conv),
      rows(g2), rows(b2), a2.astype(f32).reshape(1))

    return out_slab.reshape(N, C, T, V), A


def st_gcn_ref(x, A, A2, params):
    """Pure-JAX reference mirroring the PyTorch forward (training-mode BN)."""
    g1, b1, a1, wc, bc, g2, b2, a2 = params
    KT = wc.shape[2]
    pad = (KT - 1) // 2
    x1 = jnp.einsum('nctv,tvw->nctw', x, A)
    x2 = jnp.einsum('nctv,tvw->nctw', x, A2)
    xg = 0.4 * x1 + 0.6 * x2

    def bn(z, g, b):
        m = z.mean(axis=(0, 2, 3), keepdims=True)
        v = ((z - m) ** 2).mean(axis=(0, 2, 3), keepdims=True)
        return (z - m) / jnp.sqrt(v + EPS) * g.reshape(1, -1, 1, 1) + b.reshape(1, -1, 1, 1)

    xh = bn(xg, g1, b1)
    xh = jnp.where(xh >= 0, xh, a1 * xh)
    y = jax.lax.conv_general_dilated(xh, wc, (1, 1), [(pad, pad), (0, 0)],
                                     dimension_numbers=('NCHW', 'OIHW', 'NCHW'))
    y = y + bc.reshape(1, -1, 1, 1)
    y = bn(y, g2, b2)
    y = y + x
    return jnp.where(y >= 0, y, a2 * y)


if __name__ == "__main__":
    key = jax.random.PRNGKey(0)
    N, C, T, V = 2, 4, 8, 16          # in_channels == out_channels == 4
    KT = 3                            # kernel_size = (3, T); A has shape (T, V, V)
    ks = jax.random.split(key, 9)

    x = jax.random.normal(ks[0], (N, C, T, V), jnp.float32)
    A = jax.random.normal(ks[1], (T, V, V), jnp.float32) * 0.3
    A2 = jax.random.normal(ks[2], (T, V, V), jnp.float32) * 0.3

    # deterministic synthetic parameters (shapes match the nn.Module __init__)
    g1 = 1.0 + 0.1 * jax.random.normal(ks[3], (C,), jnp.float32)   # BN1 weight
    b1 = 0.1 * jax.random.normal(ks[4], (C,), jnp.float32)         # BN1 bias
    a1 = jnp.array([0.25], jnp.float32)                            # PReLU 1 slope
    w_conv = 0.2 * jax.random.normal(ks[5], (C, C, KT, 1), jnp.float32)
    b_conv = 0.1 * jax.random.normal(ks[6], (C,), jnp.float32)
    g2 = 1.0 + 0.1 * jax.random.normal(ks[7], (C,), jnp.float32)   # BN2 weight
    b2 = 0.1 * jax.random.normal(ks[8], (C,), jnp.float32)         # BN2 bias
    a2 = jnp.array([0.25], jnp.float32)                            # final PReLU slope
    params = (g1, b1, a1, w_conv, b_conv, g2, b2, a2)

    out, A_out = st_gcn_forward(x, A, A2, params)
    out = jax.block_until_ready(out)

    ref = st_gcn_ref(x, A, A2, params)
    assert out.shape == (N, C, T, V)
    err = float(jnp.max(jnp.abs(out - ref)))
    assert err < 1e-3, f"mismatch vs reference: {err}"
    print("KERNEL_OK")
</pallas_src>

<mosaic_0001>
module attributes {stable_mosaic.version = 11 : i64} {
  func.func @kernel(%arg0: memref<8x128xf32, #tpu.memory_space<vmem>>, %arg1: memref<128x128xf32, #tpu.memory_space<vmem>>, %arg2: memref<8x8xf32, #tpu.memory_space<vmem>>, %arg3: memref<8x1xf32, #tpu.memory_space<vmem>>, %arg4: memref<8x1xf32, #tpu.memory_space<vmem>>, %arg5: memref<1xf32, #tpu.memory_space<smem>>, %arg6: memref<8x24xf32, #tpu.memory_space<vmem>>, %arg7: memref<8x1xf32, #tpu.memory_space<vmem>>, %arg8: memref<8x1xf32, #tpu.memory_space<vmem>>, %arg9: memref<8x1xf32, #tpu.memory_space<vmem>>, %arg10: memref<1xf32, #tpu.memory_space<smem>>, %arg11: memref<8x128xf32, #tpu.memory_space<vmem>>) attributes {dimension_semantics = [], scalar_prefetch = 0 : i64, scratch_operands = 0 : i64, tpu.core_type = #tpu.core_type<tc>} {
    %c0 = arith.constant 0 : index
    %c0_0 = arith.constant 0 : index
    %0 = vector.load %arg0[%c0, %c0_0] : memref<8x128xf32, #tpu.memory_space<vmem>>, vector<8x128xf32>
    %c0_1 = arith.constant 0 : index
    %c0_2 = arith.constant 0 : index
    %1 = vector.load %arg1[%c0_1, %c0_2] : memref<128x128xf32, #tpu.memory_space<vmem>>, vector<128x128xf32>
    %cst = arith.constant dense<0.000000e+00> : vector<8x128xf32>
    %2 = tpu.matmul %0, %1, %cst {dimension_numbers = #tpu.dot_dimension_numbers<[1], [0], [0], [1], [0, 0, 1, 1], [], []>} : vector<8x128xf32>, vector<128x128xf32>, vector<8x128xf32> -> vector<8x128xf32>
    %c0_3 = arith.constant 0 : index
    %c0_4 = arith.constant 0 : index
    %3 = vector.load %arg2[%c0_3, %c0_4] : memref<8x8xf32, #tpu.memory_space<vmem>>, vector<8x8xf32>
    %c0_5 = arith.constant 0 : index
    %c0_6 = arith.constant 0 : index
    %4 = vector.load %arg3[%c0_5, %c0_6] : memref<8x1xf32, #tpu.memory_space<vmem>>, vector<8x1xf32>
    %c0_7 = arith.constant 0 : index
    %c0_8 = arith.constant 0 : index
    %5 = vector.load %arg4[%c0_7, %c0_8] : memref<8x1xf32, #tpu.memory_space<vmem>>, vector<8x1xf32>
    %cst_9 = arith.constant dense<0.000000e+00> : vector<8xf32>
    %6 = vector.multi_reduction <add>, %2, %cst_9 [1] : vector<8x128xf32> to vector<8xf32>
    %7 = vector.shape_cast %6 : vector<8xf32> to vector<8x1xf32>
    %8 = arith.mulf %2, %2 : vector<8x128xf32>
    %cst_10 = arith.constant dense<0.000000e+00> : vector<8xf32>
    %9 = vector.multi_reduction <add>, %8, %cst_10 [1] : vector<8x128xf32> to vector<8xf32>
    %10 = vector.shape_cast %9 : vector<8xf32> to vector<8x1xf32>
    %11 = tpu.concatenate %7, %10 in 1 : vector<8x1xf32>, vector<8x1xf32> -> vector<8x2xf32>
    %cst_11 = arith.constant dense<0.000000e+00> : vector<8x2xf32>
    %12 = tpu.matmul %3, %11, %cst_11 {dimension_numbers = #tpu.dot_dimension_numbers<[1], [0], [0], [1], [0, 0, 1, 1], [], []>} : vector<8x8xf32>, vector<8x2xf32>, vector<8x2xf32> -> vector<8x2xf32>
    %13 = vector.extract_strided_slice %12 {offsets = [0, 0], sizes = [8, 1], strides = [1, 1]} : vector<8x2xf32> to vector<8x1xf32>
    %14 = vector.extract_strided_slice %12 {offsets = [0, 1], sizes = [8, 1], strides = [1, 1]} : vector<8x2xf32> to vector<8x1xf32>
    %15 = arith.mulf %13, %13 : vector<8x1xf32>
    %16 = arith.subf %14, %15 : vector<8x1xf32>
    %17 = vector.broadcast %13 : vector<8x1xf32> to vector<8x128xf32>
    %18 = arith.subf %2, %17 : vector<8x128xf32>
    %cst_12 = arith.constant 9.99999974E-6 : f32
    %19 = vector.broadcast %cst_12 : f32 to vector<8x1xf32>
    %20 = arith.addf %16, %19 : vector<8x1xf32>
    %21 = math.rsqrt %20 : vector<8x1xf32>
    %22 = vector.broadcast %21 : vector<8x1xf32> to vector<8x128xf32>
    %23 = arith.mulf %18, %22 : vector<8x128xf32>
    %24 = vector.broadcast %4 : vector<8x1xf32> to vector<8x128xf32>
    %25 = arith.mulf %23, %24 : vector<8x128xf32>
    %26 = vector.broadcast %5 : vector<8x1xf32> to vector<8x128xf32>
    %27 = arith.addf %25, %26 : vector<8x128xf32>
    %c0_13 = arith.constant 0 : index
    %28 = memref.load %arg5[%c0_13] : memref<1xf32, #tpu.memory_space<smem>>
    %cst_14 = arith.constant 0.000000e+00 : f32
    %29 = vector.broadcast %cst_14 : f32 to vector<8x128xf32>
    %30 = arith.cmpf oge, %27, %29 : vector<8x128xf32>
    %31 = vector.broadcast %28 : f32 to vector<8x128xf32>
    %32 = arith.mulf %31, %27 : vector<8x128xf32>
    %33 = arith.select %30, %27, %32 : vector<8x128xi1>, vector<8x128xf32>
    %cst_15 = arith.constant 0.000000e+00 : f32
    %34 = vector.broadcast %cst_15 : f32 to vector<8x16xf32>
    %35 = vector.extract_strided_slice %33 {offsets = [0, 0], sizes = [8, 112], strides = [1, 1]} : vector<8x128xf32> to vector<8x112xf32>
    %36 = tpu.concatenate %34, %35 in 1 : vector<8x16xf32>, vector<8x112xf32> -> vector<8x128xf32>
    %cst_16 = arith.constant 0.000000e+00 : f32
    %37 = vector.broadcast %cst_16 : f32 to vector<8x16xf32>
    %38 = vector.extract_strided_slice %33 {offsets = [0, 16], sizes = [8, 112], strides = [1, 1]} : vector<8x128xf32> to vector<8x112xf32>
    %39 = tpu.concatenate %38, %37 in 1 : vector<8x112xf32>, vector<8x16xf32> -> vector<8x128xf32>
    %40 = tpu.concatenate %36, %33, %39 in 0 : vector<8x128xf32>, vector<8x128xf32>, vector<8x128xf32> -> vector<24x128xf32>
    %c0_17 = arith.constant 0 : index
    %c0_18 = arith.constant 0 : index
    %41 = vector.load %arg6[%c0_17, %c0_18] : memref<8x24xf32, #tpu.memory_space<vmem>>, vector<8x24xf32>
    %cst_19 = arith.constant dense<0.000000e+00> : vector<8x128xf32>
    %42 = tpu.matmul %41, %40, %cst_19 {dimension_numbers = #tpu.dot_dimension_numbers<[1], [0], [0], [1], [0, 0, 1, 1], [], []>} : vector<8x24xf32>, vector<24x128xf32>, vector<8x128xf32> -> vector<8x128xf32>
    %c0_20 = arith.constant 0 : index
    %c0_21 = arith.constant 0 : index
    %43 = vector.load %arg7[%c0_20, %c0_21] : memref<8x1xf32, #tpu.memory_space<vmem>>, vector<8x1xf32>
    %44 = vector.broadcast %43 : vector<8x1xf32> to vector<8x128xf32>
    %45 = arith.addf %42, %44 : vector<8x128xf32>
    %c0_22 = arith.constant 0 : index
    %c0_23 = arith.constant 0 : index
    %46 = vector.load %arg8[%c0_22, %c0_23] : memref<8x1xf32, #tpu.memory_space<vmem>>, vector<8x1xf32>
    %c0_24 = arith.constant 0 : index
    %c0_25 = arith.constant 0 : index
    %47 = vector.load %arg9[%c0_24, %c0_25] : memref<8x1xf32, #tpu.memory_space<vmem>>, vector<8x1xf32>
    %cst_26 = arith.constant dense<0.000000e+00> : vector<8xf32>
    %48 = vector.multi_reduction <add>, %45, %cst_26 [1] : vector<8x128xf32> to vector<8xf32>
    %49 = vector.shape_cast %48 : vector<8xf32> to vector<8x1xf32>
    %50 = arith.mulf %45, %45 : vector<8x128xf32>
    %cst_27 = arith.constant dense<0.000000e+00> : vector<8xf32>
    %51 = vector.multi_reduction <add>, %50, %cst_27 [1] : vector<8x128xf32> to vector<8xf32>
    %52 = vector.shape_cast %51 : vector<8xf32> to vector<8x1xf32>
    %53 = tpu.concatenate %49, %52 in 1 : vector<8x1xf32>, vector<8x1xf32> -> vector<8x2xf32>
    %cst_28 = arith.constant dense<0.000000e+00> : vector<8x2xf32>
    %54 = tpu.matmul %3, %53, %cst_28 {dimension_numbers = #tpu.dot_dimension_numbers<[1], [0], [0], [1], [0, 0, 1, 1], [], []>} : vector<8x8xf32>, vector<8x2xf32>, vector<8x2xf32> -> vector<8x2xf32>
    %55 = vector.extract_strided_slice %54 {offsets = [0, 0], sizes = [8, 1], strides = [1, 1]} : vector<8x2xf32> to vector<8x1xf32>
    %56 = vector.extract_strided_slice %54 {offsets = [0, 1], sizes = [8, 1], strides = [1, 1]} : vector<8x2xf32> to vector<8x1xf32>
    %57 = arith.mulf %55, %55 : vector<8x1xf32>
    %58 = arith.subf %56, %57 : vector<8x1xf32>
    %59 = vector.broadcast %55 : vector<8x1xf32> to vector<8x128xf32>
    %60 = arith.subf %45, %59 : vector<8x128xf32>
    %cst_29 = arith.constant 9.99999974E-6 : f32
    %61 = vector.broadcast %cst_29 : f32 to vector<8x1xf32>
    %62 = arith.addf %58, %61 : vector<8x1xf32>
    %63 = math.rsqrt %62 : vector<8x1xf32>
    %64 = vector.broadcast %63 : vector<8x1xf32> to vector<8x128xf32>
    %65 = arith.mulf %60, %64 : vector<8x128xf32>
    %66 = vector.broadcast %46 : vector<8x1xf32> to vector<8x128xf32>
    %67 = arith.mulf %65, %66 : vector<8x128xf32>
    %68 = vector.broadcast %47 : vector<8x1xf32> to vector<8x128xf32>
    %69 = arith.addf %67, %68 : vector<8x128xf32>
    %70 = arith.addf %69, %0 : vector<8x128xf32>
    %c0_30 = arith.constant 0 : index
    %71 = memref.load %arg10[%c0_30] : memref<1xf32, #tpu.memory_space<smem>>
    %cst_31 = arith.constant 0.000000e+00 : f32
    %72 = vector.broadcast %cst_31 : f32 to vector<8x128xf32>
    %73 = arith.cmpf oge, %70, %72 : vector<8x128xf32>
    %74 = vector.broadcast %71 : f32 to vector<8x128xf32>
    %75 = arith.mulf %74, %70 : vector<8x128xf32>
    %76 = arith.select %73, %70, %75 : vector<8x128xi1>, vector<8x128xf32>
    %c0_32 = arith.constant 0 : index
    %c0_33 = arith.constant 0 : index
    %77 = vector.load %arg11[%c0_32, %c0_33] : memref<8x128xf32, #tpu.memory_space<vmem>>, vector<8x128xf32>
    tpu.vector_store %arg11[%c0_32, %c0_33], %76 {strides = array<i32>} : memref<8x128xf32, #tpu.memory_space<vmem>>, vector<8x128xf32>,
    return
  }
}

</mosaic_0001>

<llo_original>
// kernel: tpu_custom_call.1
$region0: #{tpu_custom_call.1}
  #allocation0 [shape = 'u32[]', space=smem, size = 0x4, offset = 0x4, fixed_abs, tag = 'smem constant byte address 0x4 - core index']
  #allocation1 [shape = 'u32[144,128]{1,0:T(1,128)}', space=vmem, size = 0x12000, scoped, tag = 'internal scratch']
  #allocation2 [shape = 'f32[1]{0:T(128)S(6)}', space=smem, size = 0x200, scoped, tag = 'scoped memory for tpu_custom_call.1']
  #allocation3 [shape = 'f32[1]{0:T(128)S(6)}', space=smem, size = 0x200, scoped, tag = 'scoped memory for tpu_custom_call.1']
  %s0 = inlined_call_operand.vmem [shape: f32[8,128], index: 0, kind: input, shape index: {}]
  %s1 = inlined_call_operand.hbm [shape: f32[128,128], index: 1, kind: input, shape index: {}]
  %s2 = inlined_call_operand.vmem [shape: f32[8,8], index: 2, kind: input, shape index: {}]
  %s3 = inlined_call_operand.vmem [shape: f32[8,1], index: 3, kind: input, shape index: {}]
  %s4 = inlined_call_operand.vmem [shape: f32[8,1], index: 4, kind: input, shape index: {}]
  %s5 = inlined_call_operand.<no memory space> [shape: f32[1], index: 5, kind: input, shape index: {}]
  %s6 = inlined_call_operand.vmem [shape: f32[8,24], index: 6, kind: input, shape index: {}]
  %s7 = inlined_call_operand.vmem [shape: f32[8,1], index: 7, kind: input, shape index: {}]
  %s8 = inlined_call_operand.vmem [shape: f32[8,1], index: 8, kind: input, shape index: {}]
  %s9 = inlined_call_operand.vmem [shape: f32[8,1], index: 9, kind: input, shape index: {}]
  %s10 = inlined_call_operand.<no memory space> [shape: f32[1], index: 10, kind: input, shape index: {}]
  %s11 = inlined_call_operand.hbm [shape: f32[8,128], index: 11, kind: output, shape index: {}]
  %s12 = sld [smem:[#allocation0]]
  $region58: #{tpu_custom_call.1} parent=0
    _
  %s14 = ssub.s32 1, %s12
  %s15 = scalar_select 0, %s14, %s12
  %16 = sst [smem:[#allocation2]] %s5
  %17 = sst [smem:[#allocation3]] %s10
  $region1: #{tpu_custom_call.1} parent=0
    #allocation4 [shape = 'u8[65536]{0}', space=vmem, size = 0x10000, scoped, tag = 'input window, operand 1, single buffered']
    #allocation5 [shape = 's32[1]{0}', space=sflag, size = 0x4, scoped, tag = 'scoped memory for tpu_custom_call.1']
    #allocation6 [shape = 's32[1]{0}', space=sflag, size = 0x4, scoped, tag = 'scoped memory for tpu_custom_call.1']
    #allocation7 [shape = 'u8[4096]{0}', space=vmem, size = 0x1000, scoped, tag = 'output window, operand 0, single buffered']
    %18 = vsyncpa [#allocation5], 0
    %19 = vsyncpa [#allocation6], 0
    // Predicated region
    $region2: #{tpu_custom_call.1} parent=1 // pred_check
      _
    $region3: #{tpu_custom_call.1} parent=1 // pred_check_branch
      %21 = sbr.rel (0) target = $region5
    $region4: #{tpu_custom_call.1} parent=1 // pred_region
      _
    $region5: #{tpu_custom_call.1} parent=1 // pred_fallthru
      _
    // Predicated region
    $region6: #{tpu_custom_call.1} parent=1 // pred_check
      _
    $region7: #{tpu_custom_call.1} parent=1 // pred_check_branch
      %23 = sbr.rel (0) target = $region9
    $region8: #{tpu_custom_call.1} parent=1 // pred_region
      %s25 = ssub.s32 2048, 2048
      %26 = vsyncadd [#allocation5], %s25
      %s27 = sshll.u32 [#allocation4], 4
      %s28 = int_to_ptr.vmem [resolvable:$true] %s27
      %33 = dma.hbm_to_vmem [thread:$0]  %s1, 2048, %s28, [#allocation5], 128, 128, 8
    $region9: #{tpu_custom_call.1} parent=1 // pred_fallthru
      _
    // Predicated region
    $region10: #{tpu_custom_call.1} parent=1 // pred_check
      _
    $region11: #{tpu_custom_call.1} parent=1 // pred_check_branch
      %35 = sbr.rel (0) target = $region13
    $region12: #{tpu_custom_call.1} parent=1 // pred_region
      _
    $region13: #{tpu_custom_call.1} parent=1 // pred_fallthru
      _
    // Predicated region
    $region14: #{tpu_custom_call.1} parent=1 // pred_check
      _
    $region15: #{tpu_custom_call.1} parent=1 // pred_check_branch
      %37 = sbr.rel (0) target = $region17
    $region16: #{tpu_custom_call.1} parent=1 // pred_region
      _
    $region17: #{tpu_custom_call.1} parent=1 // pred_fallthru
      _
    // Predicated region
    $region18: #{tpu_custom_call.1} parent=1 // pred_check
      _
    $region19: #{tpu_custom_call.1} parent=1 // pred_check_branch
      %39 = sbr.rel (0) target = $region21
    $region20: #{tpu_custom_call.1} parent=1 // pred_region
      _
    $region21: #{tpu_custom_call.1} parent=1 // pred_fallthru
      _
    // Predicated region
    $region22: #{tpu_custom_call.1} parent=1 // pred_check
      _
    $region23: #{tpu_custom_call.1} parent=1 // pred_check_branch
      %41 = sbr.rel (0) target = $region25
    $region24: #{tpu_custom_call.1} parent=1 // pred_region
      _
    $region25: #{tpu_custom_call.1} parent=1 // pred_fallthru
      _
    // Predicated region
    $region26: #{tpu_custom_call.1} parent=1 // pred_check
      _
    $region27: #{tpu_custom_call.1} parent=1 // pred_check_branch
      %43 = sbr.rel (0) target = $region29
    $region28: #{tpu_custom_call.1} parent=1 // pred_region
      _
    $region29: #{tpu_custom_call.1} parent=1 // pred_fallthru
      _
    // Predicated region
    $region30: #{tpu_custom_call.1} parent=1 // pred_check
      _
    $region31: #{tpu_custom_call.1} parent=1 // pred_check_branch
      %45 = sbr.rel (0) target = $region33
    $region32: #{tpu_custom_call.1} parent=1 // pred_region
      _
    $region33: #{tpu_custom_call.1} parent=1 // pred_fallthru
      _
    // Predicated region
    $region34: #{tpu_custom_call.1} parent=1 // pred_check
      _
    $region35: #{tpu_custom_call.1} parent=1 // pred_check_branch
      %47 = sbr.rel (0) target = $region37
    $region36: #{tpu_custom_call.1} parent=1 // pred_region
      _
    $region37: #{tpu_custom_call.1} parent=1 // pred_fallthru
      _
    // Predicated region
    $region38: #{tpu_custom_call.1} parent=1 // pred_check
      _
    $region39: #{tpu_custom_call.1} parent=1 // pred_check_branch
      %49 = sbr.rel (0) target = $region41
    $region40: #{tpu_custom_call.1} parent=1 // pred_region
      _
    $region41: #{tpu_custom_call.1} parent=1 // pred_fallthru
      _
    // Predicated region
    $region42: #{tpu_custom_call.1} parent=1 // pred_check
      _
    $region43: #{tpu_custom_call.1} parent=1 // pred_check_branch
      %51 = sbr.rel (0) target = $region45
    $region44: #{tpu_custom_call.1} parent=1 // pred_region
      _
    $region45: #{tpu_custom_call.1} parent=1 // pred_fallthru
      _
    // Predicated region
    $region46: #{tpu_custom_call.1} parent=1 // pred_check
      _
    $region47: #{tpu_custom_call.1} parent=1 // pred_check_branch
      %53 = sbr.rel (0) target = $region49
    $region48: #{tpu_custom_call.1} parent=1 // pred_region
      %54 = dma.done [#allocation5], 2048
    $region49: #{tpu_custom_call.1} parent=1 // pred_fallthru
      _
    %v55 = vld [vmem:[%s0] sm:$0xff]
    %v56 = vld [vmem:[#allocation4] sm:$0xff]
    %v57 = vld [vmem:[#allocation4 + $0x8] sm:$0xff]
    %v58 = vld [vmem:[#allocation4 + $0x10] sm:$0xff]
    %v59 = vld [vmem:[#allocation4 + $0x18] sm:$0xff]
    %v60 = vld [vmem:[#allocation4 + $0x20] sm:$0xff]
    %v61 = vld [vmem:[#allocation4 + $0x28] sm:$0xff]
    %v62 = vld [vmem:[#allocation4 + $0x30] sm:$0xff]
    %v63 = vld [vmem:[#allocation4 + $0x38] sm:$0xff]
    %v64 = vld [vmem:[#allocation4 + $0x40] sm:$0xff]
    %v65 = vld [vmem:[#allocation4 + $0x48] sm:$0xff]
    %v66 = vld [vmem:[#allocation4 + $0x50] sm:$0xff]
    %v67 = vld [vmem:[#allocation4 + $0x58] sm:$0xff]
    %v68 = vld [vmem:[#allocation4 + $0x60] sm:$0xff]
    %v69 = vld [vmem:[#allocation4 + $0x68] sm:$0xff]
    %v70 = vld [vmem:[#allocation4 + $0x70] sm:$0xff]
    %v71 = vld [vmem:[#allocation4 + $0x78] sm:$0xff]
    %72 = vmatprep.subr.mxu0 0.0
    %73 = vmatpush1.msra.mxu0 %v56
    %74 = vmatprep.subr.mxu0 0.0
    %75 = vmatpush1.msra.mxu0 %v57
    %76 = vmatprep.subr.mxu0 0.0
    %77 = vmatpush1.msra.mxu0 %v58
    %78 = vmatprep.subr.mxu0 0.0
    %79 = vmatpush1.msra.mxu0 %v59
    %80 = vmatprep.subr.mxu0 0.0
    %81 = vmatpush1.msra.mxu0 %v60
    %82 = vmatprep.subr.mxu0 0.0
    %83 = vmatpush1.msra.mxu0 %v61
    %84 = vmatprep.subr.mxu0 0.0
    %85 = vmatpush1.msra.mxu0 %v62
    %86 = vmatprep.subr.mxu0 0.0
    %87 = vmatpush1.msra.mxu0 %v63
    %88 = vmatprep.subr.mxu0 0.0
    %89 = vmatpush1.msra.mxu0 %v64
    %90 = vmatprep.subr.mxu0 0.0
    %91 = vmatpush1.msra.mxu0 %v65
    %92 = vmatprep.subr.mxu0 0.0
    %93 = vmatpush1.msra.mxu0 %v66
    %94 = vmatprep.subr.mxu0 0.0
    %95 = vmatpush1.msra.mxu0 %v67
    %96 = vmatprep.subr.mxu0 0.0
    %97 = vmatpush1.msra.mxu0 %v68
    %98 = vmatprep.subr.mxu0 0.0
    %99 = vmatpush1.msra.mxu0 %v69
    %100 = vmatprep.subr.mxu0 0.0
    %101 = vmatpush1.msra.mxu0 %v70
    %102 = vmatprep.subr.mxu0 0.0
    %103 = vmatpush1.msra.mxu0 %v71
    %104 = vmatprep.subr.mxu0 0.0
    %105 = vmatpush1.msra.mxu0 0.0
    %106 = vmatprep.subr.mxu0 0.0
    %107 = vmatpush1.msra.mxu0 0.0
    %108 = vmatprep.subr.mxu0 0.0
    %109 = vmatpush1.msra.mxu0 0.0
    %110 = vmatprep.subr.mxu0 0.0
    %111 = vmatpush1.msra.mxu0 0.0
    %112 = vmatprep.subr.mxu0 0.0
    %113 = vmatpush1.msra.mxu0 0.0
    %114 = vmatprep.subr.mxu0 0.0
    %115 = vmatpush1.msra.mxu0 0.0
    %116 = vmatprep.subr.mxu0 0.0
    %117 = vmatpush1.msra.mxu0 0.0
    %118 = vmatprep.subr.mxu0 0.0
    %119 = vmatpush1.msra.mxu0 0.0
    %120 = vmatprep.subr.mxu0 0.0
    %121 = vmatpush1.msra.mxu0 0.0
    %122 = vmatprep.subr.mxu0 0.0
    %123 = vmatpush1.msra.mxu0 0.0
    %124 = vmatprep.subr.mxu0 0.0
    %125 = vmatpush1.msra.mxu0 0.0
    %126 = vmatprep.subr.mxu0 0.0
    %127 = vmatpush1.msra.mxu0 0.0
    %128 = vmatprep.subr.mxu0 0.0
    %129 = vmatpush1.msra.mxu0 0.0
    %130 = vmatprep.subr.mxu0 0.0
    %131 = vmatpush1.msra.mxu0 0.0
    %132 = vmatprep.subr.mxu0 0.0
    %133 = vmatpush1.msra.mxu0 0.0
    %134 = vmatprep.subr.mxu0 0.0
    %135 = vmatpush1.msra.mxu0 0.0
    %136 = vmatprep.mubr.f32.mxu0 0.0
    %137 = vmatmul.mubr.f32.gmra.mrb[0].mxu0 %v55
    %v138 = vpop.f32.mrb[0].mxu0
    %v139 = vadd.f32 0.0, %v138
    %v140 = vpop.f32.mrb[0].mxu0
    %141 = vdwg.mxu0
    %v142 = vld [vmem:[%s2] sm:$0xff]
    %v143 = vld [vmem:[%s3] sm:$0xff]
    %v144 = vld [vmem:[%s4] sm:$0xff]
    %145 = vadd.xlane.f32.xlu0 %v139
    %v146 = vpop.xlane.xlu0 %145
    %v147 = vmul.f32 %v139, %v139
    %148 = vadd.xlane.f32.xlu0 %v147
    %v149 = vpop.xlane.xlu0 %148
    %vm150 = vcmask 7168
    %v151 = vsel %vm150, %v146, %v149
    %vm152 = vcmask 64512
    %v154 = vsel %vm152, %v142, 0
    %156 = vmatprep.subr.mxu0 0.0
    %157 = vmatpush1.msra.mxu0 %v151
    %158 = vmatprep.subr.mxu0 0.0
    %159 = vmatpush1.msra.mxu0 0.0
    %160 = vmatprep.subr.mxu0 0.0
    %161 = vmatpush1.msra.mxu0 0.0
    %162 = vmatprep.subr.mxu0 0.0
    %163 = vmatpush1.msra.mxu0 0.0
    %164 = vmatprep.subr.mxu0 0.0
    %165 = vmatpush1.msra.mxu0 0.0
    %166 = vmatprep.subr.mxu0 0.0
    %167 = vmatpush1.msra.mxu0 0.0
    %168 = vmatprep.subr.mxu0 0.0
    %169 = vmatpush1.msra.mxu0 0.0
    %170 = vmatprep.subr.mxu0 0.0
    %171 = vmatpush1.msra.mxu0 0.0
    %172 = vmatprep.subr.mxu0 0.0
    %173 = vmatpush1.msra.mxu0 0.0
    %174 = vmatprep.subr.mxu0 0.0
    %175 = vmatpush1.msra.mxu0 0.0
    %176 = vmatprep.subr.mxu0 0.0
    %177 = vmatpush1.msra.mxu0 0.0
    %178 = vmatprep.subr.mxu0 0.0
    %179 = vmatpush1.msra.mxu0 0.0
    %180 = vmatprep.subr.mxu0 0.0
    %181 = vmatpush1.msra.mxu0 0.0
    %182 = vmatprep.subr.mxu0 0.0
    %183 = vmatpush1.msra.mxu0 0.0
    %184 = vmatprep.subr.mxu0 0.0
    %185 = vmatpush1.msra.mxu0 0.0
    %186 = vmatprep.subr.mxu0 0.0
    %187 = vmatpush1.msra.mxu0 0.0
    %188 = vmatprep.subr.mxu0 0.0
    %189 = vmatpush1.msra.mxu0 0.0
    %190 = vmatprep.subr.mxu0 0.0
    %191 = vmatpush1.msra.mxu0 0.0
    %192 = vmatprep.subr.mxu0 0.0
    %193 = vmatpush1.msra.mxu0 0.0
    %194 = vmatprep.subr.mxu0 0.0
    %195 = vmatpush1.msra.mxu0 0.0
    %196 = vmatprep.subr.mxu0 0.0
    %197 = vmatpush1.msra.mxu0 0.0
    %198 = vmatprep.subr.mxu0 0.0
    %199 = vmatpush1.msra.mxu0 0.0
    %200 = vmatprep.subr.mxu0 0.0
    %201 = vmatpush1.msra.mxu0 0.0
    %202 = vmatprep.subr.mxu0 0.0
    %203 = vmatpush1.msra.mxu0 0.0
    %204 = vmatprep.subr.mxu0 0.0
    %205 = vmatpush1.msra.mxu0 0.0
    %206 = vmatprep.subr.mxu0 0.0
    %207 = vmatpush1.msra.mxu0 0.0
    %208 = vmatprep.subr.mxu0 0.0
    %209 = vmatpush1.msra.mxu0 0.0
    %210 = vmatprep.subr.mxu0 0.0
    %211 = vmatpush1.msra.mxu0 0.0
    %212 = vmatprep.subr.mxu0 0.0
    %213 = vmatpush1.msra.mxu0 0.0
    %214 = vmatprep.subr.mxu0 0.0
    %215 = vmatpush1.msra.mxu0 0.0
    %216 = vmatprep.subr.mxu0 0.0
    %217 = vmatpush1.msra.mxu0 0.0
    %218 = vmatprep.subr.mxu0 0.0
    %219 = vmatpush1.msra.mxu0 0.0
    %220 = vmatprep.mubr.f32.mxu0 0.0
    %221 = vmatmul.mubr.f32.gmra.mrb[0].mxu0 %v154
    %v222 = vpop.f32.mrb[0].mxu0
    %v223 = vadd.f32 0.0, %v222
    %v224 = vpop.f32.mrb[0].mxu0
    %225 = vdwg.mxu0
    %v226 = vmul.f32 %v223, %v223
    %228 = vrot.lane.b32.xlu0 %v226, 1
    %v229 = vpop.permute.xlu0 %228
    %v231 = vsub.f32 %v223, %v229
    %233 = vset.pattern.permute.xlu0 0
    %234 = vperm.xlu0 %233, %v223
    %v235 = vpop.permute.xlu0 %234
    %v237 = vsub.f32 %v139, %v235
    %v238 = vadd.f32 %v231, 1e-05
    %v239 = vrsqrt.pop %v238
    %241 = vset.pattern.permute.xlu0 1
    %242 = vperm.xlu0 %241, %v239
    %v243 = vpop.permute.xlu0 %242
    %v245 = vmul.f32 %v237, %v243
    %247 = vset.pattern.permute.xlu0 0
    %248 = vperm.xlu0 %247, %v143
    %v249 = vpop.permute.xlu0 %248
    %v251 = vmul.f32 %v245, %v249
    %253 = vset.pattern.permute.xlu0 0
    %254 = vperm.xlu0 %253, %v144
    %v255 = vpop.permute.xlu0 %254
    %v257 = vadd.f32 %v251, %v255
    %s258 = sld [smem:[#allocation2]]
    %vm259 = vcmp.ge.f32.partialorder %v257, 0.0
    %v260 = vstv %s258
    %v261 = vmul.f32 %v260, %v257
    %v262 = vsel %vm259, %v257, %v261
    %264 = vrot.lane.b32.xlu0 %v262, 16
    %v265 = vpop.permute.xlu0 %264
    %vm267 = vcmask 130048
    %v268 = vsel %vm267, 0.0, %v265
    %269 = vrot.lane.b32.xlu0 %v262, 112
    %v270 = vpop.permute.xlu0 %269
    %vm272 = vcmask 916480
    %v273 = vsel %vm272, %v270, 0.0
    %v274 = vld [vmem:[%s6] sm:$0xff]
    %v275 = vld [vmem:[%s7] sm:$0xff]
    %277 = vset.pattern.permute.xlu0 0
    %278 = vperm.xlu0 %277, %v275
    %v279 = vpop.permute.xlu0 %278
    %vm281 = vcmask 195584
    %v283 = vsel %vm281, %v274, 0
    %285 = vmatprep.subr.mxu0 0.0
    %286 = vmatpush1.msra.mxu0 %v268
    %287 = vmatprep.subr.mxu0 0.0
    %288 = vmatpush1.msra.mxu0 %v262
    %289 = vmatprep.subr.mxu0 0.0
    %290 = vmatpush1.msra.mxu0 %v273
    %291 = vmatprep.subr.mxu0 0.0
    %292 = vmatpush1.msra.mxu0 0.0
    %293 = vmatprep.subr.mxu0 0.0
    %294 = vmatpush1.msra.mxu0 0.0
    %295 = vmatprep.subr.mxu0 0.0
    %296 = vmatpush1.msra.mxu0 0.0
    %297 = vmatprep.subr.mxu0 0.0
    %298 = vmatpush1.msra.mxu0 0.0
    %299 = vmatprep.subr.mxu0 0.0
    %300 = vmatpush1.msra.mxu0 0.0
    %301 = vmatprep.subr.mxu0 0.0
    %302 = vmatpush1.msra.mxu0 0.0
    %303 = vmatprep.subr.mxu0 0.0
    %304 = vmatpush1.msra.mxu0 0.0
    %305 = vmatprep.subr.mxu0 0.0
    %306 = vmatpush1.msra.mxu0 0.0
    %307 = vmatprep.subr.mxu0 0.0
    %308 = vmatpush1.msra.mxu0 0.0
    %309 = vmatprep.subr.mxu0 0.0
    %310 = vmatpush1.msra.mxu0 0.0
    %311 = vmatprep.subr.mxu0 0.0
    %312 = vmatpush1.msra.mxu0 0.0
    %313 = vmatprep.subr.mxu0 0.0
    %314 = vmatpush1.msra.mxu0 0.0
    %315 = vmatprep.subr.mxu0 0.0
    %316 = vmatpush1.msra.mxu0 0.0
    %317 = vmatprep.subr.mxu0 0.0
    %318 = vmatpush1.msra.mxu0 0.0
    %319 = vmatprep.subr.mxu0 0.0
    %320 = vmatpush1.msra.mxu0 0.0
    %321 = vmatprep.subr.mxu0 0.0
    %322 = vmatpush1.msra.mxu0 0.0
    %323 = vmatprep.subr.mxu0 0.0
    %324 = vmatpush1.msra.mxu0 0.0
    %325 = vmatprep.subr.mxu0 0.0
    %326 = vmatpush1.msra.mxu0 0.0
    %327 = vmatprep.subr.mxu0 0.0
    %328 = vmatpush1.msra.mxu0 0.0
    %329 = vmatprep.subr.mxu0 0.0
    %330 = vmatpush1.msra.mxu0 0.0
    %331 = vmatprep.subr.mxu0 0.0
    %332 = vmatpush1.msra.mxu0 0.0
    %333 = vmatprep.subr.mxu0 0.0
    %334 = vmatpush1.msra.mxu0 0.0
    %335 = vmatprep.subr.mxu0 0.0
    %336 = vmatpush1.msra.mxu0 0.0
    %337 = vmatprep.subr.mxu0 0.0
    %338 = vmatpush1.msra.mxu0 0.0
    %339 = vmatprep.subr.mxu0 0.0
    %340 = vmatpush1.msra.mxu0 0.0
    %341 = vmatprep.subr.mxu0 0.0
    %342 = vmatpush1.msra.mxu0 0.0
    %343 = vmatprep.subr.mxu0 0.0
    %344 = vmatpush1.msra.mxu0 0.0
    %345 = vmatprep.subr.mxu0 0.0
    %346 = vmatpush1.msra.mxu0 0.0
    %347 = vmatprep.subr.mxu0 0.0
    %348 = vmatpush1.msra.mxu0 0.0
    %349 = vmatprep.mubr.f32.mxu0 0.0
    %350 = vmatmul.mubr.f32.gmra.mrb[0].mxu0 %v283
    %v351 = vpop.f32.mrb[0].mxu0
    %v352 = vadd.f32 %v279, %v351
    %v353 = vpop.f32.mrb[0].mxu0
    %354 = vdwg.mxu0
    %v355 = vld [vmem:[%s8] sm:$0xff]
    %v356 = vld [vmem:[%s9] sm:$0xff]
    %357 = vadd.xlane.f32.xlu0 %v352
    %v358 = vpop.xlane.xlu0 %357
    %v359 = vmul.f32 %v352, %v352
    %360 = vadd.xlane.f32.xlu0 %v359
    %v361 = vpop.xlane.xlu0 %360
    %v362 = vsel %vm150, %v358, %v361
    %363 = vmatprep.subr.mxu0 0.0
    %364 = vmatpush1.msra.mxu0 %v362
    %365 = vmatprep.subr.mxu0 0.0
    %366 = vmatpush1.msra.mxu0 0.0
    %367 = vmatprep.subr.mxu0 0.0
    %368 = vmatpush1.msra.mxu0 0.0
    %369 = vmatprep.subr.mxu0 0.0
    %370 = vmatpush1.msra.mxu0 0.0
    %371 = vmatprep.subr.mxu0 0.0
    %372 = vmatpush1.msra.mxu0 0.0
    %373 = vmatprep.subr.mxu0 0.0
    %374 = vmatpush1.msra.mxu0 0.0
    %375 = vmatprep.subr.mxu0 0.0
    %376 = vmatpush1.msra.mxu0 0.0
    %377 = vmatprep.subr.mxu0 0.0
    %378 = vmatpush1.msra.mxu0 0.0
    %379 = vmatprep.subr.mxu0 0.0
    %380 = vmatpush1.msra.mxu0 0.0
    %381 = vmatprep.subr.mxu0 0.0
    %382 = vmatpush1.msra.mxu0 0.0
    %383 = vmatprep.subr.mxu0 0.0
    %384 = vmatpush1.msra.mxu0 0.0
    %385 = vmatprep.subr.mxu0 0.0
    %386 = vmatpush1.msra.mxu0 0.0
    %387 = vmatprep.subr.mxu0 0.0
    %388 = vmatpush1.msra.mxu0 0.0
    %389 = vmatprep.subr.mxu0 0.0
    %390 = vmatpush1.msra.mxu0 0.0
    %391 = vmatprep.subr.mxu0 0.0
    %392 = vmatpush1.msra.mxu0 0.0
    %393 = vmatprep.subr.mxu0 0.0
    %394 = vmatpush1.msra.mxu0 0.0
    %395 = vmatprep.subr.mxu0 0.0
    %396 = vmatpush1.msra.mxu0 0.0
    %397 = vmatprep.subr.mxu0 0.0
    %398 = vmatpush1.msra.mxu0 0.0
    %399 = vmatprep.subr.mxu0 0.0
    %400 = vmatpush1.msra.mxu0 0.0
    %401 = vmatprep.subr.mxu0 0.0
    %402 = vmatpush1.msra.mxu0 0.0
    %403 = vmatprep.subr.mxu0 0.0
    %404 = vmatpush1.msra.mxu0 0.0
    %405 = vmatprep.subr.mxu0 0.0
    %406 = vmatpush1.msra.mxu0 0.0
    %407 = vmatprep.subr.mxu0 0.0
    %408 = vmatpush1.msra.mxu0 0.0
    %409 = vmatprep.subr.mxu0 0.0
    %410 = vmatpush1.msra.mxu0 0.0
    %411 = vmatprep.subr.mxu0 0.0
    %412 = vmatpush1.msra.mxu0 0.0
    %413 = vmatprep.subr.mxu0 0.0
    %414 = vmatpush1.msra.mxu0 0.0
    %415 = vmatprep.subr.mxu0 0.0
    %416 = vmatpush1.msra.mxu0 0.0
    %417 = vmatprep.subr.mxu0 0.0
    %418 = vmatpush1.msra.mxu0 0.0
    %419 = vmatprep.subr.mxu0 0.0
    %420 = vmatpush1.msra.mxu0 0.0
    %421 = vmatprep.subr.mxu0 0.0
    %422 = vmatpush1.msra.mxu0 0.0
    %423 = vmatprep.subr.mxu0 0.0
    %424 = vmatpush1.msra.mxu0 0.0
    %425 = vmatprep.subr.mxu0 0.0
    %426 = vmatpush1.msra.mxu0 0.0
    %427 = vmatprep.mubr.f32.mxu0 0.0
    %428 = vmatmul.mubr.f32.gmra.mrb[0].mxu0 %v154
    %v429 = vpop.f32.mrb[0].mxu0
    %v430 = vadd.f32 0.0, %v429
    %v431 = vpop.f32.mrb[0].mxu0
    %432 = vdwg.mxu0
    %v433 = vmul.f32 %v430, %v430
    %435 = vrot.lane.b32.xlu0 %v433, 1
    %v436 = vpop.permute.xlu0 %435
    %v438 = vsub.f32 %v430, %v436
    %440 = vset.pattern.permute.xlu0 0
    %441 = vperm.xlu0 %440, %v430
    %v442 = vpop.permute.xlu0 %441
    %v444 = vsub.f32 %v352, %v442
    %v445 = vadd.f32 %v438, 1e-05
    %v446 = vrsqrt.pop %v445
    %448 = vset.pattern.permute.xlu0 1
    %449 = vperm.xlu0 %448, %v446
    %v450 = vpop.permute.xlu0 %449
    %v452 = vmul.f32 %v444, %v450
    %454 = vset.pattern.permute.xlu0 0
    %455 = vperm.xlu0 %454, %v355
    %v456 = vpop.permute.xlu0 %455
    %v458 = vmul.f32 %v452, %v456
    %460 = vset.pattern.permute.xlu0 0
    %461 = vperm.xlu0 %460, %v356
    %v462 = vpop.permute.xlu0 %461
    %v464 = vadd.f32 %v458, %v462
    %v465 = vadd.f32 %v464, %v55
    %s466 = sld [smem:[#allocation3]]
    %vm467 = vcmp.ge.f32.partialorder %v465, 0.0
    %v468 = vstv %s466
    %v469 = vmul.f32 %v468, %v465
    %v470 = vsel %vm467, %v465, %v469
    %471 = vst [vmem:[#allocation7] sm:$0xff] %v470
    // Predicated region
    $region50: #{tpu_custom_call.1} parent=1 // pred_check
      _
    $region51: #{tpu_custom_call.1} parent=1 // pred_check_branch
      %473 = sbr.rel (0) target = $region53
    $region52: #{tpu_custom_call.1} parent=1 // pred_region
      %s475 = ssub.s32 128, 128
      %476 = vsyncadd [#allocation6], %s475
      %s478 = sshll.u32 [#allocation7], 4
      %s479 = int_to_ptr.vmem [resolvable:$true] %s478
      %481 = dma.vmem_to_hbm [thread:$0]  %s479, 128, %s11, [#allocation6]
    $region53: #{tpu_custom_call.1} parent=1 // pred_fallthru
      _
    // Predicated region
    $region54: #{tpu_custom_call.1} parent=1 // pred_check
      _
    $region55: #{tpu_custom_call.1} parent=1 // pred_check_branch
      %483 = sbr.rel (0) target = $region57
    $region56: #{tpu_custom_call.1} parent=1 // pred_region
      %484 = dma.done [#allocation6], 128
    $region57: #{tpu_custom_call.1} parent=1 // pred_fallthru
      _
    %485 = vsyncpa [#allocation5], 1
    %486 = vsyncpa [#allocation6], 1

</llo_original>
